<compile_context>
chip_gen: v6e
topology: v6e:2x2x1
jax: 0.10.0
libtpu: 0.0.40
codegen_flags: <defaults>
</compile_context>

<pallas_src>
import jax
import jax.numpy as jnp
from jax.experimental import pallas as pl
from jax.experimental.pallas import tpu as pltpu


def _dense_kernel(x_ref, w_ref, b_ref, o_ref, acc_ref):
    # x_ref: (tm, tk)  w_ref: (tk, tn)  b_ref: (1, tn)  o_ref: (tm, tn)
    # acc_ref: (tm, tn) f32 scratch, resident across the K grid axis.
    @pl.when(pl.program_id(2) == 0)
    def _init():
        acc_ref[...] = jnp.zeros_like(acc_ref)

    acc_ref[...] += jnp.dot(
        x_ref[...], w_ref[...], preferred_element_type=jnp.float32
    )

    @pl.when(pl.program_id(2) == pl.num_programs(2) - 1)
    def _finalize():
        out = acc_ref[...] + b_ref[...].astype(jnp.float32)
        # activation == Identity (module default) -> nothing to apply
        o_ref[...] = out.astype(o_ref.dtype)


def _round_up(x, m):
    return ((x + m - 1) // m) * m


def _pick_tiles(M, K, N):
    # MXU/layout-friendly tiles: second-to-last dims multiples of 8,
    # last dims multiples of 128; don't over-tile tiny problems.
    tm = 256 if M >= 256 else _round_up(M, 8)
    tn = 256 if N >= 256 else _round_up(N, 128)
    tk = 512 if K >= 512 else _round_up(K, 128)
    return tm, tn, tk


@jax.jit
def dense_forward(x, w_t, b):
    """x: (M, K), w_t: (K, N) (== PyTorch weight transposed), b: (N,)."""
    M, K = x.shape
    Kw, N = w_t.shape
    assert K == Kw

    tm, tn, tk = _pick_tiles(M, K, N)
    Mp, Kp, Np = _round_up(M, tm), _round_up(K, tk), _round_up(N, tn)

    xp = x if (Mp, Kp) == (M, K) else jnp.pad(x, ((0, Mp - M), (0, Kp - K)))
    wp = w_t if (Kp, Np) == (K, N) else jnp.pad(w_t, ((0, Kp - K), (0, Np - N)))
    bp = b if Np == N else jnp.pad(b, (0, Np - N))
    b2 = bp.reshape(1, Np)

    grid = (Mp // tm, Np // tn, Kp // tk)

    out = pl.pallas_call(
        _dense_kernel,
        out_shape=jax.ShapeDtypeStruct((Mp, Np), x.dtype),
        grid_spec=pltpu.PrefetchScalarGridSpec(
            num_scalar_prefetch=0,
            grid=grid,
            in_specs=[
                pl.BlockSpec((tm, tk), lambda i, j, k: (i, k)),  # x tile
                pl.BlockSpec((tk, tn), lambda i, j, k: (k, j)),  # weight tile
                pl.BlockSpec((1, tn), lambda i, j, k: (0, j)),   # bias tile
            ],
            out_specs=pl.BlockSpec((tm, tn), lambda i, j, k: (i, j)),
            scratch_shapes=[pltpu.VMEM((tm, tn), jnp.float32)],
        ),
        compiler_params=pltpu.CompilerParams(
            dimension_semantics=("parallel", "parallel", "arbitrary")
        ),
    )(xp, wp, b2)

    return out[:M, :N]


def reference_dense(x, w_t, b):
    return x @ w_t + b[None, :]


if __name__ == "__main__":
    key = jax.random.PRNGKey(0)
    k_x, k_w, k_b, k_x2, k_w2, k_b2 = jax.random.split(key, 6)

    # --- Small case matching the module's typical usage -------------------
    batch = 16
    in_features = 32
    out_features = 64

    x = jax.random.normal(k_x, (batch, in_features), dtype=jnp.float32)

    # Deterministic parameter init (mimics nn.Linear's uniform(-1/sqrt(K), 1/sqrt(K))).
    limit = 1.0 / (in_features ** 0.5)
    w = jax.random.uniform(k_w, (out_features, in_features),
                           minval=-limit, maxval=limit, dtype=jnp.float32)
    b = jax.random.uniform(k_b, (out_features,),
                           minval=-limit, maxval=limit, dtype=jnp.float32)
    w_t = w.T  # (in_features, out_features) kernel layout

    y = jax.block_until_ready(dense_forward(x, w_t, b))
    y_ref = reference_dense(x, w_t, b)
    assert y.shape == (batch, out_features)
    assert jnp.allclose(y, y_ref, atol=1e-5, rtol=1e-5)

    # --- Larger case exercising multi-tile grid + padding path -------------
    M2, K2, N2 = 384, 256, 384
    x2 = jax.random.normal(k_x2, (M2, K2), dtype=jnp.float32)
    limit2 = 1.0 / (K2 ** 0.5)
    w2 = jax.random.uniform(k_w2, (N2, K2), minval=-limit2, maxval=limit2,
                            dtype=jnp.float32)
    b2 = jax.random.uniform(k_b2, (N2,), minval=-limit2, maxval=limit2,
                            dtype=jnp.float32)
    y2 = jax.block_until_ready(dense_forward(x2, w2.T, b2))
    y2_ref = reference_dense(x2, w2.T, b2)
    assert y2.shape == (M2, N2)
    assert jnp.allclose(y2, y2_ref, atol=1e-4, rtol=1e-4)

    print("KERNEL_OK")
</pallas_src>

<mosaic_0001>
module attributes {stable_mosaic.version = 11 : i64} {
  func.func @_dense_kernel(%arg0: i32, %arg1: i32, %arg2: i32, %arg3: memref<16x128xf32, #tpu.memory_space<vmem>>, %arg4: memref<128x128xf32, #tpu.memory_space<vmem>>, %arg5: memref<1x128xf32, #tpu.memory_space<vmem>>, %arg6: memref<16x128xf32, #tpu.memory_space<vmem>>, %arg7: memref<16x128xf32, #tpu.memory_space<vmem>>) attributes {dimension_semantics = [#tpu.dimension_semantics<parallel>, #tpu.dimension_semantics<parallel>, #tpu.dimension_semantics<arbitrary>], iteration_bounds = array<i64: 1, 1, 1>, scalar_prefetch = 0 : i64, scratch_operands = 1 : i64, tpu.core_type = #tpu.core_type<tc>, window_params = [{transform_indices = @transform_0, window_bounds = array<i64: 16, 128>}, {transform_indices = @transform_1, window_bounds = array<i64: 128, 128>}, {transform_indices = @transform_2, window_bounds = array<i64: 1, 128>}, {transform_indices = @transform_3, window_bounds = array<i64: 16, 128>}]} {
    %c0_i32 = arith.constant 0 : i32
    %0 = arith.cmpi eq, %arg2, %c0_i32 : i32
    %1 = arith.extui %0 : i1 to i32
    %c0_i32_0 = arith.constant 0 : i32
    %2 = arith.cmpi ne, %1, %c0_i32_0 : i32
    scf.if %2 {
      %cst_10 = arith.constant 0.000000e+00 : f32
      %12 = vector.broadcast %cst_10 : f32 to vector<16x128xf32>
      %c0_11 = arith.constant 0 : index
      %c0_12 = arith.constant 0 : index
      %13 = vector.load %arg7[%c0_11, %c0_12] : memref<16x128xf32, #tpu.memory_space<vmem>>, vector<16x128xf32>
      tpu.vector_store %arg7[%c0_11, %c0_12], %12 {strides = array<i32>} : memref<16x128xf32, #tpu.memory_space<vmem>>, vector<16x128xf32>,
    } else {
    }
    %c0 = arith.constant 0 : index
    %c0_1 = arith.constant 0 : index
    %3 = vector.load %arg7[%c0, %c0_1] : memref<16x128xf32, #tpu.memory_space<vmem>>, vector<16x128xf32>
    %c0_2 = arith.constant 0 : index
    %c0_3 = arith.constant 0 : index
    %4 = vector.load %arg3[%c0_2, %c0_3] : memref<16x128xf32, #tpu.memory_space<vmem>>, vector<16x128xf32>
    %c0_4 = arith.constant 0 : index
    %c0_5 = arith.constant 0 : index
    %5 = vector.load %arg4[%c0_4, %c0_5] : memref<128x128xf32, #tpu.memory_space<vmem>>, vector<128x128xf32>
    %cst = arith.constant dense<0.000000e+00> : vector<16x128xf32>
    %6 = tpu.matmul %4, %5, %cst {dimension_numbers = #tpu.dot_dimension_numbers<[1], [0], [0], [1], [0, 0, 1, 1], [], []>} : vector<16x128xf32>, vector<128x128xf32>, vector<16x128xf32> -> vector<16x128xf32>
    %7 = arith.addf %3, %6 : vector<16x128xf32>
    %c0_6 = arith.constant 0 : index
    %c0_7 = arith.constant 0 : index
    %8 = vector.load %arg7[%c0_6, %c0_7] : memref<16x128xf32, #tpu.memory_space<vmem>>, vector<16x128xf32>
    tpu.vector_store %arg7[%c0_6, %c0_7], %7 {strides = array<i32>} : memref<16x128xf32, #tpu.memory_space<vmem>>, vector<16x128xf32>,
    %c0_i32_8 = arith.constant 0 : i32
    %9 = arith.cmpi eq, %arg2, %c0_i32_8 : i32
    %10 = arith.extui %9 : i1 to i32
    %c0_i32_9 = arith.constant 0 : i32
    %11 = arith.cmpi ne, %10, %c0_i32_9 : i32
    scf.if %11 {
      %c0_10 = arith.constant 0 : index
      %c0_11 = arith.constant 0 : index
      %12 = vector.load %arg7[%c0_10, %c0_11] : memref<16x128xf32, #tpu.memory_space<vmem>>, vector<16x128xf32>
      %c0_12 = arith.constant 0 : index
      %c0_13 = arith.constant 0 : index
      %13 = vector.load %arg5[%c0_12, %c0_13] : memref<1x128xf32, #tpu.memory_space<vmem>>, vector<1x128xf32>
      %14 = vector.broadcast %13 : vector<1x128xf32> to vector<16x128xf32>
      %15 = arith.addf %12, %14 : vector<16x128xf32>
      %c0_14 = arith.constant 0 : index
      %c0_15 = arith.constant 0 : index
      %16 = vector.load %arg6[%c0_14, %c0_15] : memref<16x128xf32, #tpu.memory_space<vmem>>, vector<16x128xf32>
      tpu.vector_store %arg6[%c0_14, %c0_15], %15 {strides = array<i32>} : memref<16x128xf32, #tpu.memory_space<vmem>>, vector<16x128xf32>,
    } else {
    }
    return
  }
  func.func @transform_0(%arg0: i32, %arg1: i32, %arg2: i32) -> (i32, i32) {
    %c0_i32 = arith.constant 0 : i32
    return %arg0, %arg2 : i32, i32
  }
  func.func @transform_1(%arg0: i32, %arg1: i32, %arg2: i32) -> (i32, i32) {
    %c0_i32 = arith.constant 0 : i32
    return %arg2, %arg1 : i32, i32
  }
  func.func @transform_2(%arg0: i32, %arg1: i32, %arg2: i32) -> (i32, i32) {
    %c0_i32 = arith.constant 0 : i32
    %c0_i32_0 = arith.constant 0 : i32
    return %c0_i32, %arg1 : i32, i32
  }
  func.func @transform_3(%arg0: i32, %arg1: i32, %arg2: i32) -> (i32, i32) {
    %c0_i32 = arith.constant 0 : i32
    return %arg0, %arg1 : i32, i32
  }
}

</mosaic_0001>

<llo_original>
// kernel: dense_forward.1
$region0: #{dense_forward.1}
  #allocation0 [shape = 'u32[]', space=smem, size = 0x4, offset = 0x4, fixed_abs, tag = 'smem constant byte address 0x4 - core index']
  #allocation1 [shape = 'u32[144,128]{1,0:T(1,128)}', space=vmem, size = 0x12000, scoped, tag = 'internal scratch']
  #allocation2 [shape = 'f32[16,128]{1,0:T(8,128)}', space=vmem, size = 0x2000, scoped, tag = 'scratch operand']
  %s0 = inlined_call_operand.vmem [shape: f32[16,128], index: 0, kind: input, shape index: {}]
  %s1 = inlined_call_operand.vmem [shape: f32[128,128], index: 1, kind: input, shape index: {}]
  %s2 = inlined_call_operand.vmem [shape: f32[1,128], index: 2, kind: input, shape index: {}]
  %s3 = inlined_call_operand.hbm [shape: f32[16,128], index: 3, kind: output, shape index: {}]
  %s4 = sld [smem:[#allocation0]]
  $region30: #{dense_forward.1} parent=0
    _
  %s6 = ssub.s32 1, %s4
  %s7 = scalar_select 0, %s6, %s4
  $region1: #{dense_forward.1} parent=0
    #allocation3 [shape = 'u8[8192]{0}', space=vmem, size = 0x2000, scoped, tag = 'output window, operand 0, single buffered']
    #allocation4 [shape = 's32[1]{0}', space=sflag, size = 0x4, scoped, tag = 'scoped memory for dense_forward.1']
    %8 = vsyncpa [#allocation4], 0
    // Predicated region
    $region2: #{dense_forward.1} parent=1 // pred_check
      _
    $region3: #{dense_forward.1} parent=1 // pred_check_branch
      %10 = sbr.rel (0) target = $region5
    $region4: #{dense_forward.1} parent=1 // pred_region
      _
    $region5: #{dense_forward.1} parent=1 // pred_fallthru
      _
    // Predicated region
    $region6: #{dense_forward.1} parent=1 // pred_check
      _
    $region7: #{dense_forward.1} parent=1 // pred_check_branch
      %12 = sbr.rel (0) target = $region9
    $region8: #{dense_forward.1} parent=1 // pred_region
      _
    $region9: #{dense_forward.1} parent=1 // pred_fallthru
      _
    // Predicated region
    $region10: #{dense_forward.1} parent=1 // pred_check
      _
    $region11: #{dense_forward.1} parent=1 // pred_check_branch
      %14 = sbr.rel (0) target = $region13
    $region12: #{dense_forward.1} parent=1 // pred_region
      _
    $region13: #{dense_forward.1} parent=1 // pred_fallthru
      _
    %p15 = scmp.eq.s32.totalorder 0, 0
    // Predicated region
    $region14: #{dense_forward.1} parent=1 // pred_check
      %p16 = pneg %p15
    $region15: #{dense_forward.1} parent=1 // pred_check_branch
      %18 = sbr.rel (%p16) target = $region17
    $region16: #{dense_forward.1} parent=1 // pred_region
      %19 = vst [vmem:[#allocation2] sm:$0xff] 0.0
      %20 = vst [vmem:[#allocation2 + $0x8] sm:$0xff] 0.0
    $region17: #{dense_forward.1} parent=1 // pred_fallthru
      _
    %v21 = vld [vmem:[#allocation2] sm:$0xff]
    %v22 = vld [vmem:[#allocation2 + $0x8] sm:$0xff]
    %v23 = vld [vmem:[%s0] sm:$0xff]
    %v24 = vld [vmem:[%s0 + $0x8] sm:$0xff]
    %v25 = vld [vmem:[%s1] sm:$0xff]
    %v26 = vld [vmem:[%s1 + $0x8] sm:$0xff]
    %v27 = vld [vmem:[%s1 + $0x10] sm:$0xff]
    %v28 = vld [vmem:[%s1 + $0x18] sm:$0xff]
    %v29 = vld [vmem:[%s1 + $0x20] sm:$0xff]
    %v30 = vld [vmem:[%s1 + $0x28] sm:$0xff]
    %v31 = vld [vmem:[%s1 + $0x30] sm:$0xff]
    %v32 = vld [vmem:[%s1 + $0x38] sm:$0xff]
    %v33 = vld [vmem:[%s1 + $0x40] sm:$0xff]
    %v34 = vld [vmem:[%s1 + $0x48] sm:$0xff]
    %v35 = vld [vmem:[%s1 + $0x50] sm:$0xff]
    %v36 = vld [vmem:[%s1 + $0x58] sm:$0xff]
    %v37 = vld [vmem:[%s1 + $0x60] sm:$0xff]
    %v38 = vld [vmem:[%s1 + $0x68] sm:$0xff]
    %v39 = vld [vmem:[%s1 + $0x70] sm:$0xff]
    %v40 = vld [vmem:[%s1 + $0x78] sm:$0xff]
    %41 = vmatprep.subr.mxu0 0.0
    %42 = vmatpush1.msra.mxu0 %v40
    %43 = vmatprep.subr.mxu0 0.0
    %44 = vmatpush1.msra.mxu0 %v39
    %45 = vmatprep.subr.mxu0 0.0
    %46 = vmatpush1.msra.mxu0 %v38
    %47 = vmatprep.subr.mxu0 0.0
    %48 = vmatpush1.msra.mxu0 %v37
    %49 = vmatprep.subr.mxu0 0.0
    %50 = vmatpush1.msra.mxu0 %v36
    %51 = vmatprep.subr.mxu0 0.0
    %52 = vmatpush1.msra.mxu0 %v35
    %53 = vmatprep.subr.mxu0 0.0
    %54 = vmatpush1.msra.mxu0 %v34
    %55 = vmatprep.subr.mxu0 0.0
    %56 = vmatpush1.msra.mxu0 %v33
    %57 = vmatprep.subr.mxu0 0.0
    %58 = vmatpush1.msra.mxu0 %v32
    %59 = vmatprep.subr.mxu0 0.0
    %60 = vmatpush1.msra.mxu0 %v31
    %61 = vmatprep.subr.mxu0 0.0
    %62 = vmatpush1.msra.mxu0 %v30
    %63 = vmatprep.subr.mxu0 0.0
    %64 = vmatpush1.msra.mxu0 %v29
    %65 = vmatprep.subr.mxu0 0.0
    %66 = vmatpush1.msra.mxu0 %v28
    %67 = vmatprep.subr.mxu0 0.0
    %68 = vmatpush1.msra.mxu0 %v27
    %69 = vmatprep.subr.mxu0 0.0
    %70 = vmatpush1.msra.mxu0 %v26
    %71 = vmatprep.subr.mxu0 0.0
    %72 = vmatpush1.msra.mxu0 %v25
    %73 = vmatprep.subr.mxu0 0.0
    %74 = vmatpush2.msra.mxu0 0.0
    %75 = vmatprep.subr.mxu0 0.0
    %76 = vmatpush2.msra.mxu0 0.0
    %77 = vmatprep.subr.mxu0 0.0
    %78 = vmatpush2.msra.mxu0 0.0
    %79 = vmatprep.subr.mxu0 0.0
    %80 = vmatpush2.msra.mxu0 0.0
    %81 = vmatprep.subr.mxu0 0.0
    %82 = vmatpush2.msra.mxu0 0.0
    %83 = vmatprep.subr.mxu0 0.0
    %84 = vmatpush2.msra.mxu0 0.0
    %85 = vmatprep.subr.mxu0 0.0
    %86 = vmatpush2.msra.mxu0 0.0
    %87 = vmatprep.subr.mxu0 0.0
    %88 = vmatpush2.msra.mxu0 0.0
    %89 = vmatprep.subr.mxu0 0.0
    %90 = vmatpush2.msra.mxu0 0.0
    %91 = vmatprep.subr.mxu0 0.0
    %92 = vmatpush2.msra.mxu0 0.0
    %93 = vmatprep.subr.mxu0 0.0
    %94 = vmatpush2.msra.mxu0 0.0
    %95 = vmatprep.subr.mxu0 0.0
    %96 = vmatpush2.msra.mxu0 0.0
    %97 = vmatprep.subr.mxu0 0.0
    %98 = vmatpush2.msra.mxu0 0.0
    %99 = vmatprep.subr.mxu0 0.0
    %100 = vmatpush2.msra.mxu0 0.0
    %101 = vmatprep.subr.mxu0 0.0
    %102 = vmatpush2.msra.mxu0 0.0
    %103 = vmatprep.subr.mxu0 0.0
    %104 = vmatpush2.msra.mxu0 0.0
    %105 = vmatprep.mubr.f32.mxu0 0.0
    %106 = vmatmul.mubr.f32.gmra.mxu0 %v23
    %v107 = vpop.f32.mrf.mxu0
    %v108 = vadd.f32 0.0, %v107
    %v109 = vpop.f32.mrf.mxu0
    %110 = vmatprep.mubr.f32.mxu0 0.0
    %111 = vmatmul.mubr.f32.gmra.mxu0 %v24
    %v112 = vpop.f32.mrf.mxu0
    %v113 = vadd.f32 0.0, %v112
    %v114 = vpop.f32.mrf.mxu0
    %115 = vdwg.mxu0
    %v116 = vadd.f32 %v21, %v108
    %v117 = vadd.f32 %v22, %v113
    %118 = vst [vmem:[#allocation2] sm:$0xff] %v116
    %119 = vst [vmem:[#allocation2 + $0x8] sm:$0xff] %v117
    // Predicated region
    $region18: #{dense_forward.1} parent=1 // pred_check
      %p120 = pneg %p15
    $region19: #{dense_forward.1} parent=1 // pred_check_branch
      %122 = sbr.rel (%p120) target = $region21
    $region20: #{dense_forward.1} parent=1 // pred_region
      %v123 = vld [vmem:[#allocation2] sm:$0xff]
      %v124 = vld [vmem:[#allocation2 + $0x8] sm:$0xff]
      %v125 = vld [vmem:[%s2] sm:$0x1]
      %v127 = vlaneseq
      %v128 = vshrl.u32 %v127, 7
      %v129 = vsub.s32 0, %v128
      %v130 = vrot.slane %v125, %v129
      %v132 = vadd.f32 %v123, %v130
      %v133 = vadd.f32 %v124, %v130
      %134 = vst [vmem:[#allocation3] sm:$0xff] %v132
      %135 = vst [vmem:[#allocation3 + $0x8] sm:$0xff] %v133
    $region21: #{dense_forward.1} parent=1 // pred_fallthru
      _
    // Predicated region
    $region22: #{dense_forward.1} parent=1 // pred_check
      _
    $region23: #{dense_forward.1} parent=1 // pred_check_branch
      %137 = sbr.rel (0) target = $region25
    $region24: #{dense_forward.1} parent=1 // pred_region
      %s139 = ssub.s32 256, 256
      %140 = vsyncadd [#allocation4], %s139
      %s141 = sshll.u32 [#allocation3], 4
      %s142 = int_to_ptr.vmem [resolvable:$true] %s141
      %147 = dma.vmem_to_hbm [thread:$0]  %s142, 256, %s3, [#allocation4], 128, 128, 8
    $region25: #{dense_forward.1} parent=1 // pred_fallthru
      _
    // Predicated region
    $region26: #{dense_forward.1} parent=1 // pred_check
      _
    $region27: #{dense_forward.1} parent=1 // pred_check_branch
      %149 = sbr.rel (0) target = $region29
    $region28: #{dense_forward.1} parent=1 // pred_region
      %150 = dma.done [#allocation4], 256
    $region29: #{dense_forward.1} parent=1 // pred_fallthru
      _
    %151 = vsyncpa [#allocation4], 1

</llo_original>
